<compile_context>
chip_gen: v5e
topology: v5e:2x2
jax: 0.10.0
libtpu: 0.0.40
codegen_flags: <defaults>
</compile_context>

<pallas_src>
import jax
import jax.numpy as jnp
from jax import lax
from jax.experimental import pallas as pl
from jax.experimental.pallas import tpu as pltpu


def _make_attn_kernel(*, n_l, l_tile, seq_len):
    """Builds the kernel body, specialized on the static L-grid layout."""
    single_l_block = (n_l == 1)

    def kernel(hid_ref, w_ref, enc_ref, out_ref, u_ref):
        # Grid = (B blocks ["parallel"], L blocks ["arbitrary", last]).
        j = pl.program_id(1)

        # Fold the Linear into the hidden state ONCE per B block:
        #   u[b, i] = sum_o hid[b, o] * W[o, i]   (energy = x @ W.T + bias,
        #   so scores[b, l] = sum_i enc[l, b, i] * u[b, i] + const_b; the
        #   per-row const is dropped -- softmax is shift-invariant).
        @pl.when(j == 0)
        def _():
            u_ref[...] = jnp.dot(
                hid_ref[...], w_ref[...],
                precision=lax.Precision.HIGHEST,
                preferred_element_type=jnp.float32)

        # Per-chunk scores[l, b] = sum_h enc[l, b, h] * u[b, h]
        # (multiply + lane reduce; the grid keeps the chunk modest).
        enc = enc_ref[...]                                   # (l_tile, b_tile, H)
        u = u_ref[...]                                       # (b_tile, H)
        scores_lb = jnp.sum(enc * u[None, :, :], axis=-1)    # (l_tile, b_tile)
        scores_bl = scores_lb.T                              # (b_tile, l_tile)

        def softmax_rows(s):
            m = jnp.max(s, axis=-1, keepdims=True)
            e = jnp.exp(s - m)
            return e / jnp.sum(e, axis=-1, keepdims=True)    # exact divide

        if single_l_block:
            # Whole sequence in one chunk (small/test sizes): softmax now.
            out_ref[...] = softmax_rows(scores_bl)
        else:
            # Mask lanes past the true sequence length (ragged last chunk).
            lane = lax.broadcasted_iota(jnp.int32, scores_bl.shape, 1)
            valid = (j * l_tile + lane) < seq_len
            scores_bl = jnp.where(valid, scores_bl, -jnp.inf)

            # Stash the raw score chunk into the resident, lane-dense output
            # row at a 128-aligned lane offset.
            l0 = pl.multiple_of(j * l_tile, l_tile)
            out_ref[:, pl.ds(l0, l_tile)] = scores_bl

            # Last chunk: one exact softmax over the fully assembled row.
            @pl.when(j == n_l - 1)
            def _():
                out_ref[...] = softmax_rows(out_ref[...])

    return kernel


def attn_general(hidden, encoder_outputs, weight, bias=None, *,
                 l_tile_target=512):
    """hidden: (1,B,H); encoder_outputs: (L,B,H); weight: (H,H); bias: (H,).

    Returns (B, 1, L) attention weights, matching Attn.forward('general').
    `bias` is accepted for nn.Linear parity but is mathematically a no-op
    under the softmax (per-row constant shift), so it is never read.
    """
    del bias
    assert l_tile_target % 128 == 0
    L, B, H = encoder_outputs.shape
    hid2d = hidden.reshape(B, H)

    # --- tile selection ------------------------------------------------------
    # B tile: full batch when small / not 8-divisible, else 8 rows per block
    # (the "parallel" axis -> sharded across TensorCores on multi-core chips).
    b_tile = B if (B < 8 or B % 8) else 8
    n_b = B // b_tile
    # L tile: full sequence when small (single chunk), else lane-dense
    # 128-multiple chunks.  Lower `l_tile_target` for very large H or on v7x
    # (64 MiB physical VMEM per core); raise it on v6e/v5e with more headroom.
    l_tile = L if L <= l_tile_target else l_tile_target
    n_l = pl.cdiv(L, l_tile)
    l_pad = n_l * l_tile

    kernel = _make_attn_kernel(n_l=n_l, l_tile=l_tile, seq_len=L)

    enc_block_bytes = l_tile * b_tile * H * 4
    vmem_limit = int(min(64 * 1024 * 1024,
                         max(32 * 1024 * 1024, 4 * enc_block_bytes + (8 << 20))))
    flops = 2 * B * H * H + 2 * L * B * H + 5 * B * L
    bytes_accessed = 4 * (L * B * H + B * H + H * H + B * l_pad)

    probs = pl.pallas_call(
        kernel,
        out_shape=jax.ShapeDtypeStruct((B, l_pad), jnp.float32),
        grid_spec=pltpu.PrefetchScalarGridSpec(
            num_scalar_prefetch=0,
            grid=(n_b, n_l),
            in_specs=[
                # hidden & weight: constant along L -> stay VMEM-resident.
                pl.BlockSpec((b_tile, H), lambda i, j: (i, 0)),
                pl.BlockSpec((H, H), lambda i, j: (0, 0)),
                # encoder_outputs streamed in native (L, B, H) layout.
                pl.BlockSpec((l_tile, b_tile, H), lambda i, j: (j, i, 0)),
            ],
            # Output row is resident across the L ("arbitrary") axis.
            out_specs=pl.BlockSpec((b_tile, l_pad), lambda i, j: (i, 0)),
            scratch_shapes=[pltpu.VMEM((b_tile, H), jnp.float32)],
        ),
        compiler_params=pltpu.CompilerParams(
            dimension_semantics=("parallel", "arbitrary"),
            vmem_limit_bytes=vmem_limit,
        ),
        cost_estimate=pl.CostEstimate(
            flops=flops, transcendentals=B * L, bytes_accessed=bytes_accessed),
    )(hid2d, weight, encoder_outputs)

    return probs[:, :L][:, None, :]                      # (B, 1, L)


def attn_general_ref(hidden, encoder_outputs, weight, bias):
    """Pure-JAX reference mirroring the PyTorch code exactly (bias included)."""
    energy = jnp.einsum("lbh,oh->lbo", encoder_outputs, weight,
                        precision=lax.Precision.HIGHEST) + bias   # nn.Linear
    scores = jnp.sum(hidden * energy, axis=2)          # (L, B)
    return jax.nn.softmax(scores.T, axis=1)[:, None, :]           # (B, 1, L)


if __name__ == "__main__":
    # Small shapes consistent with the module: seq L=8, batch B=2, hidden H=32
    L, B, H = 8, 2, 32

    key = jax.random.PRNGKey(0)
    k_hid, k_enc, k_w, k_b = jax.random.split(key, 4)

    hidden = jax.random.normal(k_hid, (1, B, H), dtype=jnp.float32)
    encoder_outputs = jax.random.normal(k_enc, (L, B, H), dtype=jnp.float32)
    # Deterministic nn.Linear(H, H) parameters (uniform like torch default init)
    bound = 1.0 / (H ** 0.5)
    weight = jax.random.uniform(k_w, (H, H), minval=-bound, maxval=bound,
                                dtype=jnp.float32)
    bias = jax.random.uniform(k_b, (H,), minval=-bound, maxval=bound,
                              dtype=jnp.float32)

    out = attn_general(hidden, encoder_outputs, weight, bias)
    out = jax.block_until_ready(out)

    ref = attn_general_ref(hidden, encoder_outputs, weight, bias)
    assert out.shape == (B, 1, L), out.shape
    # Exact softmax normalization in-kernel -> tight tolerance.
    assert jnp.allclose(out, ref, atol=2e-5, rtol=2e-5), "mismatch vs reference"
    assert jnp.allclose(jnp.sum(out, axis=-1), 1.0, atol=1e-5), "rows not normalized"

    print("KERNEL_OK")
</pallas_src>

<mosaic_0001>
module attributes {stable_mosaic.version = 11 : i64} {
  func.func @kernel(%arg0: i32, %arg1: i32, %arg2: memref<2x32xf32, #tpu.memory_space<vmem>>, %arg3: memref<32x32xf32, #tpu.memory_space<vmem>>, %arg4: memref<8x2x32xf32, #tpu.memory_space<vmem>>, %arg5: memref<2x8xf32, #tpu.memory_space<vmem>>, %arg6: memref<2x32xf32, #tpu.memory_space<vmem>>) attributes {dimension_semantics = [#tpu.dimension_semantics<parallel>, #tpu.dimension_semantics<arbitrary>], iteration_bounds = array<i64: 1, 1>, scalar_prefetch = 0 : i64, scratch_operands = 1 : i64, tpu.core_type = #tpu.core_type<tc>, window_params = [{transform_indices = @transform_0, window_bounds = array<i64: 2, 32>}, {pipeline_mode = #tpu.pipeline_mode<synchronous>, transform_indices = @transform_1, window_bounds = array<i64: 32, 32>}, {transform_indices = @transform_2, window_bounds = array<i64: 8, 2, 32>}, {transform_indices = @transform_3, window_bounds = array<i64: 2, 8>}]} {
    %c0_i32 = arith.constant 0 : i32
    %0 = arith.cmpi eq, %arg1, %c0_i32 : i32
    %1 = arith.extui %0 : i1 to i32
    %c0_i32_0 = arith.constant 0 : i32
    %2 = arith.cmpi ne, %1, %c0_i32_0 : i32
    scf.if %2 {
      %c0_9 = arith.constant 0 : index
      %c0_10 = arith.constant 0 : index
      %20 = vector.load %arg2[%c0_9, %c0_10] : memref<2x32xf32, #tpu.memory_space<vmem>>, vector<2x32xf32>
      %c0_11 = arith.constant 0 : index
      %c0_12 = arith.constant 0 : index
      %21 = vector.load %arg3[%c0_11, %c0_12] : memref<32x32xf32, #tpu.memory_space<vmem>>, vector<32x32xf32>
      %cst_13 = arith.constant dense<0.000000e+00> : vector<2x32xf32>
      %22 = tpu.matmul %20, %21, %cst_13 {dimension_numbers = #tpu.dot_dimension_numbers<[1], [0], [0], [1], [0, 0, 1, 1], [], []>, precision = #tpu.contract_precision<fp32>} : vector<2x32xf32>, vector<32x32xf32>, vector<2x32xf32> -> vector<2x32xf32>
      %c0_14 = arith.constant 0 : index
      %c0_15 = arith.constant 0 : index
      %23 = vector.load %arg6[%c0_14, %c0_15] : memref<2x32xf32, #tpu.memory_space<vmem>>, vector<2x32xf32>
      tpu.vector_store %arg6[%c0_14, %c0_15], %22 {strides = array<i32>} : memref<2x32xf32, #tpu.memory_space<vmem>>, vector<2x32xf32>,
    } else {
    }
    %c0 = arith.constant 0 : index
    %c0_1 = arith.constant 0 : index
    %c0_2 = arith.constant 0 : index
    %3 = vector.load %arg4[%c0, %c0_1, %c0_2] : memref<8x2x32xf32, #tpu.memory_space<vmem>>, vector<8x2x32xf32>
    %c0_3 = arith.constant 0 : index
    %c0_4 = arith.constant 0 : index
    %4 = vector.load %arg6[%c0_3, %c0_4] : memref<2x32xf32, #tpu.memory_space<vmem>>, vector<2x32xf32>
    %5 = vector.shape_cast %4 : vector<2x32xf32> to vector<1x2x32xf32>
    %6 = vector.broadcast %5 : vector<1x2x32xf32> to vector<8x2x32xf32>
    %7 = arith.mulf %3, %6 : vector<8x2x32xf32>
    %cst = arith.constant dense<0.000000e+00> : vector<8x2xf32>
    %8 = vector.multi_reduction <add>, %7, %cst [2] : vector<8x2x32xf32> to vector<8x2xf32>
    %9 = tpu.transpose %8, [1, 0] : vector<8x2xf32> -> vector<2x8xf32>
    %cst_5 = arith.constant dense<0xFF800000> : vector<2xf32>
    %10 = vector.multi_reduction <maximumf>, %9, %cst_5 [1] : vector<2x8xf32> to vector<2xf32>
    %11 = vector.shape_cast %10 : vector<2xf32> to vector<2x1xf32>
    %12 = vector.broadcast %11 : vector<2x1xf32> to vector<2x8xf32>
    %13 = arith.subf %9, %12 : vector<2x8xf32>
    %14 = math.exp %13 : vector<2x8xf32>
    %cst_6 = arith.constant dense<0.000000e+00> : vector<2xf32>
    %15 = vector.multi_reduction <add>, %14, %cst_6 [1] : vector<2x8xf32> to vector<2xf32>
    %16 = vector.shape_cast %15 : vector<2xf32> to vector<2x1xf32>
    %17 = vector.broadcast %16 : vector<2x1xf32> to vector<2x8xf32>
    %18 = arith.divf %14, %17 : vector<2x8xf32>
    %c0_7 = arith.constant 0 : index
    %c0_8 = arith.constant 0 : index
    %19 = vector.load %arg5[%c0_7, %c0_8] : memref<2x8xf32, #tpu.memory_space<vmem>>, vector<2x8xf32>
    tpu.vector_store %arg5[%c0_7, %c0_8], %18 {strides = array<i32>} : memref<2x8xf32, #tpu.memory_space<vmem>>, vector<2x8xf32>,
    return
  }
  func.func @transform_0(%arg0: i32, %arg1: i32) -> (i32, i32) {
    %c0_i32 = arith.constant 0 : i32
    %c0_i32_0 = arith.constant 0 : i32
    return %arg0, %c0_i32 : i32, i32
  }
  func.func @transform_1(%arg0: i32, %arg1: i32) -> (i32, i32) {
    %c0_i32 = arith.constant 0 : i32
    %c0_i32_0 = arith.constant 0 : i32
    %c0_i32_1 = arith.constant 0 : i32
    return %c0_i32, %c0_i32_0 : i32, i32
  }
  func.func @transform_2(%arg0: i32, %arg1: i32) -> (i32, i32, i32) {
    %c0_i32 = arith.constant 0 : i32
    %c0_i32_0 = arith.constant 0 : i32
    return %arg1, %arg0, %c0_i32 : i32, i32, i32
  }
  func.func @transform_3(%arg0: i32, %arg1: i32) -> (i32, i32) {
    %c0_i32 = arith.constant 0 : i32
    %c0_i32_0 = arith.constant 0 : i32
    return %arg0, %c0_i32 : i32, i32
  }
}

</mosaic_0001>

<llo_original>
// kernel: tpu_custom_call.1
$region0: #{tpu_custom_call.1}
  #allocation0 [shape = 'u32[]', space=smem, size = 0x4, offset = 0x4, fixed_abs, tag = 'smem constant byte address 0x4 - core index']
  #allocation1 [shape = 'u32[72,128]{1,0:T(1,128)}', space=vmem, size = 0x9000, scoped, tag = 'internal scratch']
  #allocation2 [shape = 'f32[2,32]{1,0:T(2,128)}', space=vmem, size = 0x400, scoped, tag = 'scratch operand']
  %s0 = inlined_call_operand.hbm [shape: f32[2,32], index: 0, kind: input, shape index: {}]
  %s1 = inlined_call_operand.hbm [shape: f32[32,32], index: 1, kind: input, shape index: {}]
  %s2 = inlined_call_operand.hbm [shape: f32[8,2,32], index: 2, kind: input, shape index: {}]
  %s3 = inlined_call_operand.hbm [shape: f32[2,8], index: 3, kind: output, shape index: {}]
  %s4 = sld [smem:[#allocation0]]
  $region38: #{tpu_custom_call.1} parent=0
    _
  %s6 = ssub.s32 1, %s4
  %s7 = scalar_select 0, %s6, %s4
  $region1: #{tpu_custom_call.1} parent=0
    #allocation3 [shape = 'u8[1024]{0}', space=vmem, size = 0x400, scoped, tag = 'input window, operand 0, single buffered']
    #allocation4 [shape = 's32[1]{0}', space=sflag, size = 0x4, scoped, tag = 'scoped memory for tpu_custom_call.1']
    #allocation5 [shape = 's32[1]{0}', space=sflag, size = 0x4, scoped, tag = 'scoped memory for tpu_custom_call.1']
    #allocation6 [shape = 'u8[16384]{0}', space=vmem, size = 0x4000, scoped, tag = 'input window, operand 1, single buffered']
    #allocation7 [shape = 's32[1]{0}', space=sflag, size = 0x4, scoped, tag = 'scoped memory for tpu_custom_call.1']
    #allocation8 [shape = 'u8[8192]{0}', space=vmem, size = 0x2000, scoped, tag = 'input window, operand 2, single buffered']
    #allocation9 [shape = 'u8[1024]{0}', space=vmem, size = 0x400, scoped, tag = 'output window, operand 0, single buffered']
    %8 = vsyncpa [#allocation4], 0
    %9 = vsyncpa [#allocation7], 0
    %10 = vsyncpa [#allocation5], 0
    // Predicated region
    $region2: #{tpu_custom_call.1} parent=1 // pred_check
      _
    $region3: #{tpu_custom_call.1} parent=1 // pred_check_branch
      %12 = sbr.rel (0) target = $region5
    $region4: #{tpu_custom_call.1} parent=1 // pred_region
      %14 = vsyncadd [#allocation4], 0
      %s16 = sshll.u32 %s0, 4
      %s17 = int_to_ptr.hbm [resolvable:$true] %s16
      %s18 = sshll.u32 [#allocation3], 4
      %s19 = int_to_ptr.vmem [resolvable:$true] %s18
      %21 = dma.hbm_to_vmem [thread:$0]  %s17, 32, %s19, [#allocation4]
    $region5: #{tpu_custom_call.1} parent=1 // pred_fallthru
      _
    // Predicated region
    $region6: #{tpu_custom_call.1} parent=1 // pred_check
      _
    $region7: #{tpu_custom_call.1} parent=1 // pred_check_branch
      %23 = sbr.rel (0) target = $region9
    $region8: #{tpu_custom_call.1} parent=1 // pred_region
      %25 = vsyncadd [#allocation7], 0
      %s26 = sshll.u32 %s1, 4
      %s27 = int_to_ptr.hbm [resolvable:$true] %s26
      %s28 = sshll.u32 [#allocation6], 4
      %s29 = int_to_ptr.vmem [resolvable:$true] %s28
      %34 = dma.hbm_to_vmem [thread:$0]  %s27, 512, %s29, [#allocation7], 128, 128, 8
    $region9: #{tpu_custom_call.1} parent=1 // pred_fallthru
      _
    // Predicated region
    $region10: #{tpu_custom_call.1} parent=1 // pred_check
      _
    $region11: #{tpu_custom_call.1} parent=1 // pred_check_branch
      %36 = sbr.rel (0) target = $region13
    $region12: #{tpu_custom_call.1} parent=1 // pred_region
      %38 = vsyncadd [#allocation7], 0
      %s39 = sshll.u32 %s2, 4
      %s40 = int_to_ptr.hbm [resolvable:$true] %s39
      %s41 = sshll.u32 [#allocation8], 4
      %s42 = int_to_ptr.vmem [resolvable:$true] %s41
      %47 = dma.hbm_to_vmem [thread:$0]  %s40, 256, %s42, [#allocation7], 32, 32, 2
    $region13: #{tpu_custom_call.1} parent=1 // pred_fallthru
      _
    // Predicated region
    $region14: #{tpu_custom_call.1} parent=1 // pred_check
      _
    $region15: #{tpu_custom_call.1} parent=1 // pred_check_branch
      %49 = sbr.rel (0) target = $region17
    $region16: #{tpu_custom_call.1} parent=1 // pred_region
      %51 = dma.done [#allocation4], 32
    $region17: #{tpu_custom_call.1} parent=1 // pred_fallthru
      _
    // Predicated region
    $region18: #{tpu_custom_call.1} parent=1 // pred_check
      _
    $region19: #{tpu_custom_call.1} parent=1 // pred_check_branch
      %53 = sbr.rel (0) target = $region21
    $region20: #{tpu_custom_call.1} parent=1 // pred_region
      %55 = dma.done [#allocation7], 512
    $region21: #{tpu_custom_call.1} parent=1 // pred_fallthru
      _
    // Predicated region
    $region22: #{tpu_custom_call.1} parent=1 // pred_check
      _
    $region23: #{tpu_custom_call.1} parent=1 // pred_check_branch
      %57 = sbr.rel (0) target = $region25
    $region24: #{tpu_custom_call.1} parent=1 // pred_region
      %59 = dma.done [#allocation7], 256
    $region25: #{tpu_custom_call.1} parent=1 // pred_fallthru
      _
    %p60 = scmp.eq.s32.totalorder 0, 0
    // Predicated region
    $region26: #{tpu_custom_call.1} parent=1 // pred_check
      %p61 = pneg %p60
    $region27: #{tpu_custom_call.1} parent=1 // pred_check_branch
      %63 = sbr.rel (%p61) target = $region29
    $region28: #{tpu_custom_call.1} parent=1 // pred_region
      %v64 = vld [vmem:[#allocation3] sm:$0x3]
      %v65 = vld [vmem:[#allocation6] sm:$0xff]
      %v66 = vld [vmem:[#allocation6 + $0x8] sm:$0xff]
      %v67 = vld [vmem:[#allocation6 + $0x10] sm:$0xff]
      %v68 = vld [vmem:[#allocation6 + $0x18] sm:$0xff]
      %vm69 = vcmask 261120
      %v71 = vsel %vm69, %v64, 0
      %73 = vmatpush.msra.mxu0 0.0
      %74 = vmatpush.msra.mxu0 0.0
      %75 = vmatpush.msra.mxu0 0.0
      %76 = vmatpush.msra.mxu0 0.0
      %77 = vmatpush.msra.mxu0 0.0
      %78 = vmatpush.msra.mxu0 0.0
      %79 = vmatpush.msra.mxu0 0.0
      %80 = vmatpush.msra.mxu0 0.0
      %81 = vmatpush.msra.mxu0 0.0
      %82 = vmatpush.msra.mxu0 0.0
      %83 = vmatpush.msra.mxu0 0.0
      %84 = vmatpush.msra.mxu0 0.0
      %v85 = vand.u32 %v68, 4294901760
      %86 = vmatpush.msra.mxu0 %v85
      %v87 = vand.u32 %v67, 4294901760
      %88 = vmatpush.msra.mxu0 %v87
      %v89 = vand.u32 %v66, 4294901760
      %90 = vmatpush.msra.mxu0 %v89
      %v91 = vand.u32 %v65, 4294901760
      %92 = vmatpush.msra.mxu0 %v91
      %v93 = vand.u32 %v71, 4294901760
      %v94 = vsub.f32 %v71, %v93
      %v95 = vand.u32 %v94, 4294901760
      %v96 = vsub.f32 %v94, %v95
      %v97 = vand.u32 %v96, 4294901760
      %98 = vmatmul.f32.gmra.mxu0 %v97
      %v99 = vpop.f32.mrf.mxu0
      %v100 = vadd.f32 0.0, %v99
      %101 = vdwg.mxu0
      %102 = vmatpush.msra.mxu0 0.0
      %103 = vmatpush.msra.mxu0 0.0
      %104 = vmatpush.msra.mxu0 0.0
      %105 = vmatpush.msra.mxu0 0.0
      %106 = vmatpush.msra.mxu0 0.0
      %107 = vmatpush.msra.mxu0 0.0
      %108 = vmatpush.msra.mxu0 0.0
      %109 = vmatpush.msra.mxu0 0.0
      %110 = vmatpush.msra.mxu0 0.0
      %111 = vmatpush.msra.mxu0 0.0
      %112 = vmatpush.msra.mxu0 0.0
      %113 = vmatpush.msra.mxu0 0.0
      %v114 = vand.u32 %v68, 4294901760
      %v115 = vsub.f32 %v68, %v114
      %v116 = vand.u32 %v115, 4294901760
      %v117 = vsub.f32 %v115, %v116
      %v118 = vand.u32 %v117, 4294901760
      %119 = vmatpush.msra.mxu0 %v118
      %v120 = vand.u32 %v67, 4294901760
      %v121 = vsub.f32 %v67, %v120
      %v122 = vand.u32 %v121, 4294901760
      %v123 = vsub.f32 %v121, %v122
      %v124 = vand.u32 %v123, 4294901760
      %125 = vmatpush.msra.mxu0 %v124
      %v126 = vand.u32 %v66, 4294901760
      %v127 = vsub.f32 %v66, %v126
      %v128 = vand.u32 %v127, 4294901760
      %v129 = vsub.f32 %v127, %v128
      %v130 = vand.u32 %v129, 4294901760
      %131 = vmatpush.msra.mxu0 %v130
      %v132 = vand.u32 %v65, 4294901760
      %v133 = vsub.f32 %v65, %v132
      %v134 = vand.u32 %v133, 4294901760
      %v135 = vsub.f32 %v133, %v134
      %v136 = vand.u32 %v135, 4294901760
      %137 = vmatpush.msra.mxu0 %v136
      %v138 = vand.u32 %v71, 4294901760
      %139 = vmatmul.f32.gmra.mxu0 %v138
      %v140 = vpop.f32.mrf.mxu0
      %v141 = vadd.f32 %v100, %v140
      %142 = vdwg.mxu0
      %143 = vmatpush.msra.mxu0 0.0
      %144 = vmatpush.msra.mxu0 0.0
      %145 = vmatpush.msra.mxu0 0.0
      %146 = vmatpush.msra.mxu0 0.0
      %147 = vmatpush.msra.mxu0 0.0
      %148 = vmatpush.msra.mxu0 0.0
      %149 = vmatpush.msra.mxu0 0.0
      %150 = vmatpush.msra.mxu0 0.0
      %151 = vmatpush.msra.mxu0 0.0
      %152 = vmatpush.msra.mxu0 0.0
      %153 = vmatpush.msra.mxu0 0.0
      %154 = vmatpush.msra.mxu0 0.0
      %v155 = vand.u32 %v68, 4294901760
      %v156 = vsub.f32 %v68, %v155
      %157 = vmatpush.msra.mxu0 %v156
      %v158 = vand.u32 %v67, 4294901760
      %v159 = vsub.f32 %v67, %v158
      %160 = vmatpush.msra.mxu0 %v159
      %v161 = vand.u32 %v66, 4294901760
      %v162 = vsub.f32 %v66, %v161
      %163 = vmatpush.msra.mxu0 %v162
      %v164 = vand.u32 %v65, 4294901760
      %v165 = vsub.f32 %v65, %v164
      %166 = vmatpush.msra.mxu0 %v165
      %v167 = vand.u32 %v71, 4294901760
      %v168 = vsub.f32 %v71, %v167
      %169 = vmatmul.f32.gmra.mxu0 %v168
      %v170 = vpop.f32.mrf.mxu0
      %v171 = vadd.f32 %v141, %v170
      %172 = vdwg.mxu0
      %173 = vmatpush.msra.mxu0 0.0
      %174 = vmatpush.msra.mxu0 0.0
      %175 = vmatpush.msra.mxu0 0.0
      %176 = vmatpush.msra.mxu0 0.0
      %177 = vmatpush.msra.mxu0 0.0
      %178 = vmatpush.msra.mxu0 0.0
      %179 = vmatpush.msra.mxu0 0.0
      %180 = vmatpush.msra.mxu0 0.0
      %181 = vmatpush.msra.mxu0 0.0
      %182 = vmatpush.msra.mxu0 0.0
      %183 = vmatpush.msra.mxu0 0.0
      %184 = vmatpush.msra.mxu0 0.0
      %v185 = vand.u32 %v68, 4294901760
      %186 = vmatpush.msra.mxu0 %v185
      %v187 = vand.u32 %v67, 4294901760
      %188 = vmatpush.msra.mxu0 %v187
      %v189 = vand.u32 %v66, 4294901760
      %190 = vmatpush.msra.mxu0 %v189
      %v191 = vand.u32 %v65, 4294901760
      %192 = vmatpush.msra.mxu0 %v191
      %v193 = vand.u32 %v71, 4294901760
      %v194 = vsub.f32 %v71, %v193
      %v195 = vand.u32 %v194, 4294901760
      %196 = vmatmul.f32.gmra.mxu0 %v195
      %v197 = vpop.f32.mrf.mxu0
      %v198 = vadd.f32 %v171, %v197
      %199 = vdwg.mxu0
      %200 = vmatpush.msra.mxu0 0.0
      %201 = vmatpush.msra.mxu0 0.0
      %202 = vmatpush.msra.mxu0 0.0
      %203 = vmatpush.msra.mxu0 0.0
      %204 = vmatpush.msra.mxu0 0.0
      %205 = vmatpush.msra.mxu0 0.0
      %206 = vmatpush.msra.mxu0 0.0
      %207 = vmatpush.msra.mxu0 0.0
      %208 = vmatpush.msra.mxu0 0.0
      %209 = vmatpush.msra.mxu0 0.0
      %210 = vmatpush.msra.mxu0 0.0
      %211 = vmatpush.msra.mxu0 0.0
      %v212 = vand.u32 %v68, 4294901760
      %v213 = vsub.f32 %v68, %v212
      %v214 = vand.u32 %v213, 4294901760
      %215 = vmatpush.msra.mxu0 %v214
      %v216 = vand.u32 %v67, 4294901760
      %v217 = vsub.f32 %v67, %v216
      %v218 = vand.u32 %v217, 4294901760
      %219 = vmatpush.msra.mxu0 %v218
      %v220 = vand.u32 %v66, 4294901760
      %v221 = vsub.f32 %v66, %v220
      %v222 = vand.u32 %v221, 4294901760
      %223 = vmatpush.msra.mxu0 %v222
      %v224 = vand.u32 %v65, 4294901760
      %v225 = vsub.f32 %v65, %v224
      %v226 = vand.u32 %v225, 4294901760
      %227 = vmatpush.msra.mxu0 %v226
      %v228 = vand.u32 %v71, 4294901760
      %229 = vmatmul.f32.gmra.mxu0 %v228
      %v230 = vpop.f32.mrf.mxu0
      %v231 = vadd.f32 %v198, %v230
      %232 = vdwg.mxu0
      %233 = vmatpush.msra.mxu0 0.0
      %234 = vmatpush.msra.mxu0 0.0
      %235 = vmatpush.msra.mxu0 0.0
      %236 = vmatpush.msra.mxu0 0.0
      %237 = vmatpush.msra.mxu0 0.0
      %238 = vmatpush.msra.mxu0 0.0
      %239 = vmatpush.msra.mxu0 0.0
      %240 = vmatpush.msra.mxu0 0.0
      %241 = vmatpush.msra.mxu0 0.0
      %242 = vmatpush.msra.mxu0 0.0
      %243 = vmatpush.msra.mxu0 0.0
      %244 = vmatpush.msra.mxu0 0.0
      %v245 = vand.u32 %v68, 4294901760
      %246 = vmatpush.msra.mxu0 %v245
      %v247 = vand.u32 %v67, 4294901760
      %248 = vmatpush.msra.mxu0 %v247
      %v249 = vand.u32 %v66, 4294901760
      %250 = vmatpush.msra.mxu0 %v249
      %v251 = vand.u32 %v65, 4294901760
      %252 = vmatpush.msra.mxu0 %v251
      %v253 = vand.u32 %v71, 4294901760
      %254 = vmatmul.f32.gmra.mxu0 %v253
      %v255 = vpop.f32.mrf.mxu0
      %v256 = vadd.f32 %v231, %v255
      %257 = vdwg.mxu0
      %vm258 = vcmask 254976
      %259 = vst.msk [vmem:[#allocation2] sm:$0x3] %vm258, %v256
    $region29: #{tpu_custom_call.1} parent=1 // pred_fallthru
      _
    %v260 = vld [vmem:[#allocation8] sm:$0x3]
    %v261 = vld [vmem:[#allocation8 + $0x2] sm:$0x3]
    %v262 = vld [vmem:[#allocation8 + $0x4] sm:$0x3]
    %v263 = vld [vmem:[#allocation8 + $0x6] sm:$0x3]
    %v264 = vld [vmem:[#allocation8 + $0x8] sm:$0x3]
    %v265 = vld [vmem:[#allocation8 + $0xa] sm:$0x3]
    %v266 = vld [vmem:[#allocation8 + $0xc] sm:$0x3]
    %v267 = vld [vmem:[#allocation8 + $0xe] sm:$0x3]
    %v268 = vld [vmem:[#allocation2] sm:$0x3]
    %v269 = vmul.f32 %v260, %v268
    %v270 = vmul.f32 %v261, %v268
    %v271 = vmul.f32 %v262, %v268
    %v272 = vmul.f32 %v263, %v268
    %v273 = vmul.f32 %v264, %v268
    %v274 = vmul.f32 %v265, %v268
    %v275 = vmul.f32 %v266, %v268
    %v276 = vmul.f32 %v267, %v268
    %vm277 = vcmask 254976
    %v278 = vsel %vm277, %v269, 0.0
    %279 = vadd.xlane.f32.xlu0 %v278
    %v280 = vpop.xlane.xlu0 %279
    %v281 = vsel %vm277, %v270, 0.0
    %282 = vadd.xlane.f32.xlu0 %v281
    %v283 = vpop.xlane.xlu0 %282
    %v284 = vsel %vm277, %v271, 0.0
    %285 = vadd.xlane.f32.xlu0 %v284
    %v286 = vpop.xlane.xlu0 %285
    %v287 = vsel %vm277, %v272, 0.0
    %288 = vadd.xlane.f32.xlu0 %v287
    %v289 = vpop.xlane.xlu0 %288
    %v290 = vsel %vm277, %v273, 0.0
    %291 = vadd.xlane.f32.xlu0 %v290
    %v292 = vpop.xlane.xlu0 %291
    %v293 = vsel %vm277, %v274, 0.0
    %294 = vadd.xlane.f32.xlu0 %v293
    %v295 = vpop.xlane.xlu0 %294
    %v296 = vsel %vm277, %v275, 0.0
    %297 = vadd.xlane.f32.xlu0 %v296
    %v298 = vpop.xlane.xlu0 %297
    %v299 = vsel %vm277, %v276, 0.0
    %300 = vadd.xlane.f32.xlu0 %v299
    %v301 = vpop.xlane.xlu0 %300
    %v310 = vlaneseq
    %v311 = vand.u32 %v310, 127
    %v312 = vperm.slane %v280, %v311
    %v313 = vperm.slane %v283, %v311
    %v314 = vperm.slane %v286, %v311
    %v315 = vperm.slane %v289, %v311
    %v316 = vperm.slane %v292, %v311
    %v317 = vperm.slane %v295, %v311
    %v318 = vperm.slane %v298, %v311
    %v319 = vperm.slane %v301, %v311
    %vm320 = vcmask 1041409
    %v321 = vsel %vm320, %v313, %v312
    %vm322 = vcmask 1042434
    %v323 = vsel %vm322, %v314, %v321
    %vm324 = vcmask 1043459
    %v325 = vsel %vm324, %v315, %v323
    %vm326 = vcmask 1044484
    %v327 = vsel %vm326, %v316, %v325
    %vm328 = vcmask 1045509
    %v329 = vsel %vm328, %v317, %v327
    %vm330 = vcmask 1046534
    %v331 = vsel %vm330, %v318, %v329
    %vm332 = vcmask 1047559
    %v333 = vsel %vm332, %v319, %v331
    %335 = vxpose.xlu0.b32.start [1/16] %v333, 128
    %336 = vxpose.xlu0.b32.cont [2/16] 0.0, 128
    %337 = vxpose.xlu0.b32.cont [3/16] 0.0, 128
    %338 = vxpose.xlu0.b32.cont [4/16] 0.0, 128
    %339 = vxpose.xlu0.b32.cont [5/16] 0.0, 128
    %340 = vxpose.xlu0.b32.cont [6/16] 0.0, 128
    %341 = vxpose.xlu0.b32.cont [7/16] 0.0, 128
    %342 = vxpose.xlu0.b32.cont [8/16] 0.0, 128
    %343 = vxpose.xlu0.b32.cont [9/16] 0.0, 128
    %344 = vxpose.xlu0.b32.cont [10/16] 0.0, 128
    %345 = vxpose.xlu0.b32.cont [11/16] 0.0, 128
    %346 = vxpose.xlu0.b32.cont [12/16] 0.0, 128
    %347 = vxpose.xlu0.b32.cont [13/16] 0.0, 128
    %348 = vxpose.xlu0.b32.cont [14/16] 0.0, 128
    %349 = vxpose.xlu0.b32.cont [15/16] 0.0, 128
    %350 = vxpose.xlu0.b32.end [16/16] 0.0, 128
    %v351 = vpop.trf.xlu0
    %v352 = vpop.trf.xlu0
    %v353 = vpop.trf.xlu0
    %v354 = vpop.trf.xlu0
    %v355 = vpop.trf.xlu0
    %v356 = vpop.trf.xlu0
    %v357 = vpop.trf.xlu0
    %v358 = vpop.trf.xlu0
    %v359 = vpop.trf.xlu0
    %v360 = vpop.trf.xlu0
    %v361 = vpop.trf.xlu0
    %v362 = vpop.trf.xlu0
    %v363 = vpop.trf.xlu0
    %v364 = vpop.trf.xlu0
    %v365 = vpop.trf.xlu0
    %v366 = vpop.trf.xlu0
    %vm367 = vcmask 58368
    %v368 = vsel %vm367, %v351, -inf
    %369 = vmax.xlane.f32.xlu0 %v368
    %v370 = vpop.xlane.xlu0 %369
    %v371 = vsub.f32 %v351, %v370
    %v372 = vmul.f32 %v371, 1.442695
    %v373 = vpow.pop %v372
    %v374 = vsel %vm367, %v373, 0.0
    %375 = vadd.xlane.f32.xlu0 %v374
    %v376 = vpop.xlane.xlu0 %375
    %v377 = vrcp.pop %v376
    %v378 = vmul.f32 %v376, %v377
    %v379 = vsub.f32 1.0, %v378
    %v380 = vmul.f32 %v377, %v379
    %v381 = vadd.f32 %v377, %v380
    %vm382 = vweird.f32 %v376
    %vm383 = vweird.f32 %v377
    %vm384 = vmor %vm382, %vm383
    %v385 = vsel %vm384, %v377, %v381
    %v386 = vand.u32 2147483647, %v376
    %vm387 = vcmp.eq.f32.partialorder %v386, 8.507059e+37
    %v388 = vand.u32 %v376, 2147483648
    %v389 = vor.u32 1.1754944e-38, %v388
    %v390 = vsel %vm387, %v389, %v385
    %v391 = vmul.f32 %v373, %v390
    %392 = vst.msk [vmem:[#allocation9] sm:$0x3] %vm367, %v391
    // Predicated region
    $region30: #{tpu_custom_call.1} parent=1 // pred_check
      _
    $region31: #{tpu_custom_call.1} parent=1 // pred_check_branch
      %394 = sbr.rel (0) target = $region33
    $region32: #{tpu_custom_call.1} parent=1 // pred_region
      %396 = vsyncadd [#allocation5], 0
      %s398 = sshll.u32 [#allocation9], 4
      %s399 = int_to_ptr.vmem [resolvable:$true] %s398
      %s400 = sshll.u32 %s3, 4
      %s401 = int_to_ptr.hbm [resolvable:$true] %s400
      %403 = dma.vmem_to_hbm [thread:$0]  %s399, 32, %s401, [#allocation5]
    $region33: #{tpu_custom_call.1} parent=1 // pred_fallthru
      _
    // Predicated region
    $region34: #{tpu_custom_call.1} parent=1 // pred_check
      _
    $region35: #{tpu_custom_call.1} parent=1 // pred_check_branch
      %405 = sbr.rel (0) target = $region37
    $region36: #{tpu_custom_call.1} parent=1 // pred_region
      %407 = dma.done [#allocation5], 32
    $region37: #{tpu_custom_call.1} parent=1 // pred_fallthru
      _
    %408 = vsyncpa [#allocation4], 1
    %409 = vsyncpa [#allocation7], 1
    %410 = vsyncpa [#allocation5], 1

</llo_original>
